<compile_context>
chip_gen: v5e
topology: v5e:2x2
jax: 0.10.0
libtpu: 0.0.40
codegen_flags: <defaults>
</compile_context>

<pallas_src>
import jax
import jax.numpy as jnp
from jax.experimental import pallas as pl
from jax.experimental.pallas import tpu as pltpu


def _round_up(n: int, m: int) -> int:
    return ((n + m - 1) // m) * m


def _linear_kernel(xt_ref, params_ref, o_ref):
    # xt_ref:     (3, rows_tile, 128) f32 in VMEM -- batch dense on (sublane, lane)
    # params_ref: (4,)                f32 in SMEM -- [w0, w1, w2, b]
    # o_ref:      (rows_tile, 128)    f32 in VMEM -- fully dense output slab
    w0 = params_ref[0]
    w1 = params_ref[1]
    w2 = params_ref[2]
    b = params_ref[3]
    # Pure VPU: three scalar-broadcast multiply-adds on dense (rows, 128) slabs.
    y = xt_ref[0] * w0 + xt_ref[1] * w1 + xt_ref[2] * w2 + b
    o_ref[...] = y.astype(o_ref.dtype)


def net_forward(x, weight, bias, *, block_lanes=256 * 1024, use_pallas=None):
    """Equivalent of Net.forward: y = x @ weight.T + bias.

    x:      (B, 3) float32
    weight: (1, 3) float32  (PyTorch nn.Linear convention: (out, in))
    bias:   (1,)   float32
    returns (B, 1) float32
    """
    B, K = x.shape
    Nout, Kw = weight.shape
    assert K == 3 and Nout == 1 and Kw == 3

    # Tiny batches: a single fused XLA pass beats pallas_call + transpose.
    if use_pallas is None:
        use_pallas = B >= 16384
    if not use_pallas:
        return x @ weight.T + bias

    R = pl.cdiv(B, 128)          # number of 128-lane rows of batch
    B128 = R * 128               # batch padded to the lane width only

    # Feature-major view of x; pad batch only to the next multiple of 128.
    xt = x.T                                                  # (3, B)
    if B128 != B:
        xt = jnp.pad(xt, ((0, 0), (0, B128 - B)))             # (3, B128)
    xt3 = xt.reshape(K, R, 128)                               # free reshape

    params = jnp.concatenate(
        [weight.reshape(-1), bias.reshape(-1)]).astype(x.dtype)   # (4,)

    # Row-tile selection:
    #  * cap at block_lanes (default 256K lanes -> 2048 rows, ~8.4 MiB live
    #    double-buffered: safe on v7x's 64 MiB VMEM, trivial on v6e/v5e),
    #  * split mid-size batches into >= 2 grid steps (v7x megacore),
    #  * for R <= 8 use the full extent (allowed by the (8,128) rule).
    max_rows = max(8, _round_up(block_lanes // 128, 8))
    if R <= 8:
        rows_tile = R
    else:
        rows_tile = min(max_rows, max(8, _round_up(pl.cdiv(R, 2), 8)))
    grid = (pl.cdiv(R, rows_tile),)

    out = pl.pallas_call(
        _linear_kernel,
        out_shape=jax.ShapeDtypeStruct((R, 128), x.dtype),
        grid=grid,
        in_specs=[
            # (3, rows_tile, 128): last two dims (rows_tile, 128) are either
            # multiples of (8, 128) or the full array extent -> dense vregs.
            pl.BlockSpec((K, rows_tile, 128), lambda i: (0, i, 0)),
            # 4 parameter floats straight into SMEM (no VMEM tile / DMA stream).
            pl.BlockSpec(memory_space=pltpu.MemorySpace.SMEM),
        ],
        out_specs=pl.BlockSpec((rows_tile, 128), lambda i: (i, 0)),
        compiler_params=pltpu.CompilerParams(
            dimension_semantics=("parallel",),
            vmem_limit_bytes=32 * 1024 * 1024,
        ),
        cost_estimate=pl.CostEstimate(
            flops=7 * B128, bytes_accessed=16 * B128, transcendentals=0),
    )(xt3, params)

    # Back to the nn.Linear output layout (B, 1), dropping lane padding.
    return out.reshape(-1)[:B].reshape(B, Nout)


if __name__ == "__main__":
    key = jax.random.PRNGKey(0)
    kx, kw, kb = jax.random.split(key, 3)

    IN, OUT = 3, 1
    # Deterministic init mimicking nn.Linear default U[-1/sqrt(in), 1/sqrt(in)].
    bound = 1.0 / jnp.sqrt(jnp.float32(IN))
    weight = jax.random.uniform(kw, (OUT, IN), jnp.float32, -bound, bound)
    bias = jax.random.uniform(kb, (OUT,), jnp.float32, -bound, bound)

    # Cases: tiny batch via the XLA short-circuit, then forced-Pallas cases
    # covering grid=(1,) with a partial row block (B=300 -> R=3), an exactly
    # tiled batch (B=1024 -> R=8), and a ragged multi-step grid (B=2000 ->
    # R=16, rows_tile=8, grid=(2,)).
    cases = [(8, False), (300, True), (1024, True), (2000, True)]
    for B, force_pallas in cases:
        kx, sub = jax.random.split(kx)
        x = jax.random.normal(sub, (B, IN), jnp.float32)

        y = jax.block_until_ready(
            net_forward(x, weight, bias, use_pallas=True if force_pallas else None))

        y_ref = x @ weight.T + bias
        assert y.shape == (B, OUT)
        assert jnp.allclose(y, y_ref, atol=1e-5, rtol=1e-5), f"mismatch at B={B}"

    print("KERNEL_OK")
</pallas_src>

<mosaic_0001>
module attributes {stable_mosaic.version = 11 : i64} {
  func.func @_linear_kernel(%arg0: i32, %arg1: memref<3x3x128xf32, #tpu.memory_space<vmem>>, %arg2: memref<4xf32, #tpu.memory_space<smem>>, %arg3: memref<3x128xf32, #tpu.memory_space<vmem>>) attributes {dimension_semantics = [#tpu.dimension_semantics<parallel>], iteration_bounds = array<i64: 1>, scalar_prefetch = 0 : i64, scratch_operands = 0 : i64, tpu.core_type = #tpu.core_type<tc>, window_params = [{transform_indices = @transform_0, window_bounds = array<i64: 3, 3, 128>}, {transform_indices = @transform_1, window_bounds = array<i64: 4>}, {transform_indices = @transform_2, window_bounds = array<i64: 3, 128>}]} {
    %c0 = arith.constant 0 : index
    %0 = memref.load %arg2[%c0] : memref<4xf32, #tpu.memory_space<smem>>
    %c1 = arith.constant 1 : index
    %1 = memref.load %arg2[%c1] : memref<4xf32, #tpu.memory_space<smem>>
    %c2 = arith.constant 2 : index
    %2 = memref.load %arg2[%c2] : memref<4xf32, #tpu.memory_space<smem>>
    %c3 = arith.constant 3 : index
    %3 = memref.load %arg2[%c3] : memref<4xf32, #tpu.memory_space<smem>>
    %c0_0 = arith.constant 0 : index
    %c0_1 = arith.constant 0 : index
    %c0_2 = arith.constant 0 : index
    %4 = vector.load %arg1[%c0_0, %c0_1, %c0_2] : memref<3x3x128xf32, #tpu.memory_space<vmem>>, vector<1x3x128xf32>
    %5 = vector.shape_cast %4 : vector<1x3x128xf32> to vector<3x128xf32>
    %6 = vector.broadcast %0 : f32 to vector<3x128xf32>
    %7 = arith.mulf %5, %6 : vector<3x128xf32>
    %c1_3 = arith.constant 1 : index
    %c0_4 = arith.constant 0 : index
    %c0_5 = arith.constant 0 : index
    %8 = vector.load %arg1[%c1_3, %c0_4, %c0_5] : memref<3x3x128xf32, #tpu.memory_space<vmem>>, vector<1x3x128xf32>
    %9 = vector.shape_cast %8 : vector<1x3x128xf32> to vector<3x128xf32>
    %10 = vector.broadcast %1 : f32 to vector<3x128xf32>
    %11 = arith.mulf %9, %10 : vector<3x128xf32>
    %12 = arith.addf %7, %11 : vector<3x128xf32>
    %c2_6 = arith.constant 2 : index
    %c0_7 = arith.constant 0 : index
    %c0_8 = arith.constant 0 : index
    %13 = vector.load %arg1[%c2_6, %c0_7, %c0_8] : memref<3x3x128xf32, #tpu.memory_space<vmem>>, vector<1x3x128xf32>
    %14 = vector.shape_cast %13 : vector<1x3x128xf32> to vector<3x128xf32>
    %15 = vector.broadcast %2 : f32 to vector<3x128xf32>
    %16 = arith.mulf %14, %15 : vector<3x128xf32>
    %17 = arith.addf %12, %16 : vector<3x128xf32>
    %18 = vector.broadcast %3 : f32 to vector<3x128xf32>
    %19 = arith.addf %17, %18 : vector<3x128xf32>
    %c0_9 = arith.constant 0 : index
    %c0_10 = arith.constant 0 : index
    %20 = vector.load %arg3[%c0_9, %c0_10] : memref<3x128xf32, #tpu.memory_space<vmem>>, vector<3x128xf32>
    tpu.vector_store %arg3[%c0_9, %c0_10], %19 {strides = array<i32>} : memref<3x128xf32, #tpu.memory_space<vmem>>, vector<3x128xf32>,
    return
  }
  func.func @transform_0(%arg0: i32) -> (i32, i32, i32) {
    %c0_i32 = arith.constant 0 : i32
    %c0_i32_0 = arith.constant 0 : i32
    %c0_i32_1 = arith.constant 0 : i32
    return %c0_i32, %arg0, %c0_i32_0 : i32, i32, i32
  }
  func.func @transform_1(%arg0: i32) -> i32 {
    %c0_i32 = arith.constant 0 : i32
    %c0_i32_0 = arith.constant 0 : i32
    return %c0_i32 : i32
  }
  func.func @transform_2(%arg0: i32) -> (i32, i32) {
    %c0_i32 = arith.constant 0 : i32
    %c0_i32_0 = arith.constant 0 : i32
    return %arg0, %c0_i32 : i32, i32
  }
}

</mosaic_0001>

<llo_original>
// kernel: tpu_custom_call.1
$region0: #{tpu_custom_call.1}
  #allocation0 [shape = 'u32[]', space=smem, size = 0x4, offset = 0x4, fixed_abs, tag = 'smem constant byte address 0x4 - core index']
  #allocation1 [shape = 'u32[72,128]{1,0:T(1,128)}', space=vmem, size = 0x9000, scoped, tag = 'internal scratch']
  %s0 = inlined_call_operand.hbm [shape: f32[3,3,128], index: 0, kind: input, shape index: {}]
  %s1 = inlined_call_operand.hbm [shape: f32[4], index: 1, kind: input, shape index: {}]
  %s2 = inlined_call_operand.hbm [shape: f32[3,128], index: 2, kind: output, shape index: {}]
  %s3 = sld [smem:[#allocation0]]
  $region26: #{tpu_custom_call.1} parent=0
    _
  %s5 = ssub.s32 1, %s3
  %s6 = scalar_select 0, %s5, %s3
  $region1: #{tpu_custom_call.1} parent=0
    #allocation2 [shape = 'u8[6144]{0}', space=vmem, size = 0x1800, scoped, tag = 'input window, operand 0, single buffered']
    #allocation3 [shape = 's32[1]{0}', space=sflag, size = 0x4, scoped, tag = 'scoped memory for tpu_custom_call.1']
    #allocation4 [shape = 's32[1]{0}', space=sflag, size = 0x4, scoped, tag = 'scoped memory for tpu_custom_call.1']
    #allocation5 [shape = 's32[1]{0}', space=sflag, size = 0x4, scoped, tag = 'scoped memory for tpu_custom_call.1']
    #allocation6 [shape = 'u8[512]{0}', space=smem, size = 0x200, scoped, tag = 'input window, operand 1, single buffered']
    #allocation7 [shape = 'u8[2048]{0}', space=vmem, size = 0x800, scoped, tag = 'output window, operand 0, single buffered']
    %7 = vsyncpa [#allocation3], 0
    %8 = vsyncpa [#allocation5], 0
    %9 = vsyncpa [#allocation4], 0
    // Predicated region
    $region2: #{tpu_custom_call.1} parent=1 // pred_check
      _
    $region3: #{tpu_custom_call.1} parent=1 // pred_check_branch
      %11 = sbr.rel (0) target = $region5
    $region4: #{tpu_custom_call.1} parent=1 // pred_region
      %13 = vsyncadd [#allocation3], 0
      %s14 = sshll.u32 %s0, 4
      %s15 = int_to_ptr.hbm [resolvable:$true] %s14
      %s16 = sshll.u32 [#allocation2], 4
      %s17 = int_to_ptr.vmem [resolvable:$true] %s16
      %22 = dma.hbm_to_vmem [thread:$0]  %s15, 192, %s17, [#allocation3], 64, 64, 4
    $region5: #{tpu_custom_call.1} parent=1 // pred_fallthru
      _
    // Predicated region
    $region6: #{tpu_custom_call.1} parent=1 // pred_check
      _
    $region7: #{tpu_custom_call.1} parent=1 // pred_check_branch
      %24 = sbr.rel (0) target = $region9
    $region8: #{tpu_custom_call.1} parent=1 // pred_region
      %26 = vsyncadd [#allocation5], 0
      %s28 = sshll.u32 %s1, 4
      %s29 = int_to_ptr.hbm [resolvable:$true] %s28
      %31 = dma.hbm_to_smem %s29, 16, [#allocation6], [#allocation5]
    $region9: #{tpu_custom_call.1} parent=1 // pred_fallthru
      _
    // Predicated region
    $region10: #{tpu_custom_call.1} parent=1 // pred_check
      _
    $region11: #{tpu_custom_call.1} parent=1 // pred_check_branch
      %33 = sbr.rel (0) target = $region13
    $region12: #{tpu_custom_call.1} parent=1 // pred_region
      %35 = dma.done [#allocation3], 192
    $region13: #{tpu_custom_call.1} parent=1 // pred_fallthru
      _
    // Predicated region
    $region14: #{tpu_custom_call.1} parent=1 // pred_check
      _
    $region15: #{tpu_custom_call.1} parent=1 // pred_check_branch
      %37 = sbr.rel (0) target = $region17
    $region16: #{tpu_custom_call.1} parent=1 // pred_region
      %39 = dma.done [#allocation5], 16
    $region17: #{tpu_custom_call.1} parent=1 // pred_fallthru
      _
    %40 = sfence
    %s41 = sld [smem:[#allocation6]]
    %s42 = sld [smem:[#allocation6 + $0x1]]
    %s43 = sld [smem:[#allocation6 + $0x2]]
    %s44 = sld [smem:[#allocation6 + $0x3]]
    %v45 = vld [vmem:[#allocation2] sm:$0x7]
    %v46 = vstv %s41
    %v47 = vmul.f32 %v45, %v46
    %s48 = scalar_lea.vmem [#allocation2], 4
    %v49 = vld [vmem:[%s48] sm:$0x7]
    %v50 = vstv %s42
    %v51 = vmul.f32 %v49, %v50
    %v52 = vadd.f32 %v47, %v51
    %s53 = scalar_lea.vmem [#allocation2], 8
    %v54 = vld [vmem:[%s53] sm:$0x7]
    %v55 = vstv %s43
    %v56 = vmul.f32 %v54, %v55
    %v57 = vadd.f32 %v52, %v56
    %v58 = vstv %s44
    %v59 = vadd.f32 %v57, %v58
    %60 = vst [vmem:[#allocation7] sm:$0x7] %v59
    // Predicated region
    $region18: #{tpu_custom_call.1} parent=1 // pred_check
      _
    $region19: #{tpu_custom_call.1} parent=1 // pred_check_branch
      %62 = sbr.rel (0) target = $region21
    $region20: #{tpu_custom_call.1} parent=1 // pred_region
      %64 = vsyncadd [#allocation4], 0
      %s66 = sshll.u32 [#allocation7], 4
      %s67 = int_to_ptr.vmem [resolvable:$true] %s66
      %s68 = sshll.u32 %s2, 4
      %s69 = int_to_ptr.hbm [resolvable:$true] %s68
      %71 = dma.vmem_to_hbm [thread:$0]  %s67, 64, %s69, [#allocation4]
    $region21: #{tpu_custom_call.1} parent=1 // pred_fallthru
      _
    // Predicated region
    $region22: #{tpu_custom_call.1} parent=1 // pred_check
      _
    $region23: #{tpu_custom_call.1} parent=1 // pred_check_branch
      %73 = sbr.rel (0) target = $region25
    $region24: #{tpu_custom_call.1} parent=1 // pred_region
      %75 = dma.done [#allocation4], 64
    $region25: #{tpu_custom_call.1} parent=1 // pred_fallthru
      _
    %76 = vsyncpa [#allocation3], 1
    %77 = vsyncpa [#allocation4], 1
    %78 = vsyncpa [#allocation5], 1

</llo_original>
